<compile_context>
chip_gen: v7x
topology: tpu7x:2x2x1
jax: 0.10.0
libtpu: 0.0.40
codegen_flags: <defaults>
</compile_context>

<pallas_src>
import functools

import jax
import jax.numpy as jnp
from jax.experimental import pallas as pl
from jax.experimental.pallas import tpu as pltpu


def _round_up(n, m):
    return ((n + m - 1) // m) * m


def _actor_critic_kernel(x_ref, w1_ref, b1_ref, w2_ref, b2_ref, wh_ref, bh_ref,
                         out_ref):
    # fc1 + ReLU : bf16 MXU operands, f32 accumulation, f32 elementwise.
    h1 = jnp.dot(x_ref[...].astype(jnp.bfloat16), w1_ref[...],
                 preferred_element_type=jnp.float32) + b1_ref[...]
    h1 = jnp.maximum(h1, 0.0)

    # fc2 + ReLU
    h2 = jnp.dot(h1.astype(jnp.bfloat16), w2_ref[...],
                 preferred_element_type=jnp.float32) + b2_ref[...]
    h2 = jnp.maximum(h2, 0.0)

    # Fused head matmul producing the full lane-dense 128-wide slab:
    #   cols 0..63 = h2 (identity block), 64..65 = actor logits, 66 = critic value.
    slab = jnp.dot(h2, wh_ref[...], preferred_element_type=jnp.float32) + bh_ref[...]

    # 2-class softmax on lanes 64/65 only, as sigmoid of the logit difference.
    # The "other" logit is brought to each logit lane with two +/-1-lane rolls
    # (XLU, cheap) instead of full 128-lane max/sum reduction trees.
    col = jax.lax.broadcasted_iota(jnp.int32, slab.shape, 1)
    is_logit = (col >= 64) & (col < 66)
    masked = jnp.where(is_logit, slab, 0.0)
    # roll by 127 == roll by -1 (cyclic over the 128-lane axis)
    other = pltpu.roll(masked, 127, axis=1) + pltpu.roll(masked, 1, axis=1)
    diff = slab - other                       # lane64: l0-l1, lane65: l1-l0
    # sigmoid(d) = 0.5*(tanh(d/2)+1)  -> single EUP tanh, no reciprocal needed.
    probs = 0.5 * (jnp.tanh(0.5 * diff) + 1.0)
    out_ref[...] = jnp.where(is_logit, probs, slab).astype(out_ref.dtype)


def actor_critic_two_heads(x, params):
    """Returns (forward_features (B,64), action_prob (B,2), state_value (B,1))."""
    B, obs_dim = x.shape
    w1, b1, w2, b2, wh, bh = params

    # Batch blocking:
    #   tiny B        -> single block (block_b = B)
    #   B > 128       -> 128..256-row blocks (fills the MXU, amortizes per-step
    #                    overhead) and grid length >= 2 so ("parallel",) shards
    #                    across v7x's two TensorCores.
    if B <= 128:
        block_b = B
    else:
        block_b = min(256, max(128, _round_up(pl.cdiv(B, 2), 8)))
    grid = (pl.cdiv(B, block_b),)

    x_spec = pl.BlockSpec((block_b, obs_dim), lambda i: (i, 0))
    out_spec = pl.BlockSpec((block_b, 128), lambda i: (i, 0))

    def const_spec(arr):
        # Full-array block, constant index -> stays VMEM-resident across grid steps.
        return pl.BlockSpec(arr.shape, lambda i: (0, 0))

    flops = 2 * B * (obs_dim * 256 + 256 * 64 + 64 * 128)
    # EUP evaluates full 128-lane vregs regardless of the logit mask.
    transcendentals = 128 * B
    bytes_accessed = (x.size * x.dtype.itemsize
                      + sum(p.size * p.dtype.itemsize for p in params)
                      + B * 128 * 4)
    cost = pl.CostEstimate(flops=flops, transcendentals=transcendentals,
                           bytes_accessed=bytes_accessed)

    slab = pl.pallas_call(
        _actor_critic_kernel,
        out_shape=jax.ShapeDtypeStruct((B, 128), jnp.float32),
        grid=grid,
        in_specs=[x_spec,
                  const_spec(w1), const_spec(b1),
                  const_spec(w2), const_spec(b2),
                  const_spec(wh), const_spec(bh)],
        out_specs=out_spec,
        compiler_params=pltpu.CompilerParams(
            dimension_semantics=("parallel",),
            vmem_limit_bytes=16 * 1024 * 1024),
        cost_estimate=cost,
    )(x, w1, b1, w2, b2, wh, bh)

    feat = slab[:, 0:64]
    probs = slab[:, 64:66]
    value = slab[:, 66:67]
    return feat, probs, value


def init_params(obs_dim, key):
    """PyTorch nn.Linear default-style init (U[-1/sqrt(fan_in), 1/sqrt(fan_in)]).
    Weights stored transposed (in, out); fc1/fc2 weights in bf16; heads fused into
    a single (64, 128) f32 weight with an identity passthrough block for feat."""
    def linear(key, fan_in, fan_out):
        kw, kb = jax.random.split(key)
        bound = 1.0 / jnp.sqrt(jnp.float32(fan_in))
        w = jax.random.uniform(kw, (fan_in, fan_out), jnp.float32, -bound, bound)
        b = jax.random.uniform(kb, (1, fan_out), jnp.float32, -bound, bound)
        return w, b

    k1, k2, k3, k4 = jax.random.split(key, 4)
    w1, b1 = linear(k1, obs_dim, 256)
    w2, b2 = linear(k2, 256, 64)
    wa, ba = linear(k3, 64, 2)   # act_fc
    wc, bc = linear(k4, 64, 1)   # cri_fc

    wh = jnp.zeros((64, 128), jnp.float32)
    wh = wh.at[:, 0:64].set(jnp.eye(64, dtype=jnp.float32))   # feat passthrough
    wh = wh.at[:, 64:66].set(wa)
    wh = wh.at[:, 66:67].set(wc)
    bh = jnp.zeros((1, 128), jnp.float32)
    bh = bh.at[:, 64:66].set(ba)
    bh = bh.at[:, 66:67].set(bc)

    return (w1.astype(jnp.bfloat16), b1, w2.astype(jnp.bfloat16), b2, wh, bh)


def reference(x, params):
    """Pure-JAX reference of the same math (same bf16 weight storage)."""
    w1, b1, w2, b2, wh, bh = params
    h1 = jnp.maximum(jnp.dot(x.astype(jnp.bfloat16), w1,
                             preferred_element_type=jnp.float32) + b1, 0.0)
    h2 = jnp.maximum(jnp.dot(h1.astype(jnp.bfloat16), w2,
                             preferred_element_type=jnp.float32) + b2, 0.0)
    logits = h2 @ wh[:, 64:66] + bh[:, 64:66]
    value = h2 @ wh[:, 66:67] + bh[:, 66:67]
    probs = jax.nn.softmax(logits, axis=1)
    return h2, probs, value


if __name__ == "__main__":
    B, OBS_DIM = 8, 32  # small shapes consistent with ActorCritic(obs_dim=32)

    key = jax.random.PRNGKey(0)
    k_params, k_x = jax.random.split(key)
    params = init_params(OBS_DIM, k_params)
    x = jax.random.normal(k_x, (B, OBS_DIM), jnp.float32)

    fn = jax.jit(functools.partial(actor_critic_two_heads))
    feat, probs, value = jax.block_until_ready(fn(x, params))

    feat_r, probs_r, value_r = reference(x, params)
    assert jnp.allclose(feat, feat_r, atol=1e-4), "forward features mismatch"
    assert jnp.allclose(probs, probs_r, atol=1e-4), "actor probs mismatch"
    assert jnp.allclose(value, value_r, atol=1e-4), "critic value mismatch"
    assert jnp.allclose(jnp.sum(probs, axis=1), 1.0, atol=1e-4)

    # TODO(synk): Categorical sampling / log_prob in act() is RNG-driven control
    # logic, left to host-side JAX rather than the Pallas kernel.
    print("KERNEL_OK")
</pallas_src>

<mosaic_0001>
module attributes {stable_mosaic.version = 11 : i64} {
  func.func @_actor_critic_kernel(%arg0: i32, %arg1: memref<8x32xf32, #tpu.memory_space<vmem>>, %arg2: memref<32x256xbf16, #tpu.memory_space<vmem>>, %arg3: memref<1x256xf32, #tpu.memory_space<vmem>>, %arg4: memref<256x64xbf16, #tpu.memory_space<vmem>>, %arg5: memref<1x64xf32, #tpu.memory_space<vmem>>, %arg6: memref<64x128xf32, #tpu.memory_space<vmem>>, %arg7: memref<1x128xf32, #tpu.memory_space<vmem>>, %arg8: memref<8x128xf32, #tpu.memory_space<vmem>>) attributes {dimension_semantics = [#tpu.dimension_semantics<parallel>], iteration_bounds = array<i64: 1>, scalar_prefetch = 0 : i64, scratch_operands = 0 : i64, tpu.core_type = #tpu.core_type<tc>, window_params = [{transform_indices = @transform_0, window_bounds = array<i64: 8, 32>}, {pipeline_mode = #tpu.pipeline_mode<synchronous>, transform_indices = @transform_1, window_bounds = array<i64: 32, 256>}, {pipeline_mode = #tpu.pipeline_mode<synchronous>, transform_indices = @transform_2, window_bounds = array<i64: 1, 256>}, {pipeline_mode = #tpu.pipeline_mode<synchronous>, transform_indices = @transform_3, window_bounds = array<i64: 256, 64>}, {pipeline_mode = #tpu.pipeline_mode<synchronous>, transform_indices = @transform_4, window_bounds = array<i64: 1, 64>}, {pipeline_mode = #tpu.pipeline_mode<synchronous>, transform_indices = @transform_5, window_bounds = array<i64: 64, 128>}, {pipeline_mode = #tpu.pipeline_mode<synchronous>, transform_indices = @transform_6, window_bounds = array<i64: 1, 128>}, {transform_indices = @transform_7, window_bounds = array<i64: 8, 128>}]} {
    %c0 = arith.constant 0 : index
    %c0_0 = arith.constant 0 : index
    %0 = vector.load %arg1[%c0, %c0_0] : memref<8x32xf32, #tpu.memory_space<vmem>>, vector<8x32xf32>
    %1 = arith.truncf %0 : vector<8x32xf32> to vector<8x32xbf16>
    %c0_1 = arith.constant 0 : index
    %c0_2 = arith.constant 0 : index
    %2 = vector.load %arg2[%c0_1, %c0_2] : memref<32x256xbf16, #tpu.memory_space<vmem>>, vector<32x256xbf16>
    %cst = arith.constant dense<0.000000e+00> : vector<8x256xf32>
    %3 = tpu.matmul %1, %2, %cst {dimension_numbers = #tpu.dot_dimension_numbers<[1], [0], [0], [1], [0, 0, 1, 1], [], []>} : vector<8x32xbf16>, vector<32x256xbf16>, vector<8x256xf32> -> vector<8x256xf32>
    %c0_3 = arith.constant 0 : index
    %c0_4 = arith.constant 0 : index
    %4 = vector.load %arg3[%c0_3, %c0_4] : memref<1x256xf32, #tpu.memory_space<vmem>>, vector<1x256xf32>
    %5 = vector.broadcast %4 : vector<1x256xf32> to vector<8x256xf32>
    %6 = arith.addf %3, %5 : vector<8x256xf32>
    %cst_5 = arith.constant 0.000000e+00 : f32
    %7 = vector.broadcast %cst_5 : f32 to vector<8x256xf32>
    %8 = arith.maximumf %6, %7 : vector<8x256xf32>
    %9 = arith.truncf %8 : vector<8x256xf32> to vector<8x256xbf16>
    %c0_6 = arith.constant 0 : index
    %c0_7 = arith.constant 0 : index
    %10 = vector.load %arg4[%c0_6, %c0_7] : memref<256x64xbf16, #tpu.memory_space<vmem>>, vector<256x64xbf16>
    %cst_8 = arith.constant dense<0.000000e+00> : vector<8x64xf32>
    %11 = tpu.matmul %9, %10, %cst_8 {dimension_numbers = #tpu.dot_dimension_numbers<[1], [0], [0], [1], [0, 0, 1, 1], [], []>} : vector<8x256xbf16>, vector<256x64xbf16>, vector<8x64xf32> -> vector<8x64xf32>
    %c0_9 = arith.constant 0 : index
    %c0_10 = arith.constant 0 : index
    %12 = vector.load %arg5[%c0_9, %c0_10] : memref<1x64xf32, #tpu.memory_space<vmem>>, vector<1x64xf32>
    %13 = vector.broadcast %12 : vector<1x64xf32> to vector<8x64xf32>
    %14 = arith.addf %11, %13 : vector<8x64xf32>
    %cst_11 = arith.constant 0.000000e+00 : f32
    %15 = vector.broadcast %cst_11 : f32 to vector<8x64xf32>
    %16 = arith.maximumf %14, %15 : vector<8x64xf32>
    %c0_12 = arith.constant 0 : index
    %c0_13 = arith.constant 0 : index
    %17 = vector.load %arg6[%c0_12, %c0_13] : memref<64x128xf32, #tpu.memory_space<vmem>>, vector<64x128xf32>
    %cst_14 = arith.constant dense<0.000000e+00> : vector<8x128xf32>
    %18 = tpu.matmul %16, %17, %cst_14 {dimension_numbers = #tpu.dot_dimension_numbers<[1], [0], [0], [1], [0, 0, 1, 1], [], []>} : vector<8x64xf32>, vector<64x128xf32>, vector<8x128xf32> -> vector<8x128xf32>
    %c0_15 = arith.constant 0 : index
    %c0_16 = arith.constant 0 : index
    %19 = vector.load %arg7[%c0_15, %c0_16] : memref<1x128xf32, #tpu.memory_space<vmem>>, vector<1x128xf32>
    %20 = vector.broadcast %19 : vector<1x128xf32> to vector<8x128xf32>
    %21 = arith.addf %18, %20 : vector<8x128xf32>
    %22 = tpu.iota {dimensions = array<i32: 1>} : vector<8x128xi32>
    %c64_i32 = arith.constant 64 : i32
    %23 = vector.broadcast %c64_i32 : i32 to vector<8x128xi32>
    %24 = arith.cmpi sge, %22, %23 : vector<8x128xi32>
    %c66_i32 = arith.constant 66 : i32
    %25 = vector.broadcast %c66_i32 : i32 to vector<8x128xi32>
    %26 = arith.cmpi slt, %22, %25 : vector<8x128xi32>
    %27 = arith.andi %24, %26 : vector<8x128xi1>
    %cst_17 = arith.constant 0.000000e+00 : f32
    %28 = vector.broadcast %cst_17 : f32 to vector<8x128xf32>
    %29 = arith.select %27, %21, %28 : vector<8x128xi1>, vector<8x128xf32>
    %c127_i32 = arith.constant 127 : i32
    %30 = tpu.dynamic_rotate %29 by %c127_i32 dim 1 : vector<8x128xf32>, i32 -> vector<8x128xf32>
    %c1_i32 = arith.constant 1 : i32
    %31 = tpu.dynamic_rotate %29 by %c1_i32 dim 1 : vector<8x128xf32>, i32 -> vector<8x128xf32>
    %32 = arith.addf %30, %31 : vector<8x128xf32>
    %33 = arith.subf %21, %32 : vector<8x128xf32>
    %cst_18 = arith.constant 5.000000e-01 : f32
    %34 = vector.broadcast %cst_18 : f32 to vector<8x128xf32>
    %35 = arith.mulf %34, %33 : vector<8x128xf32>
    %36 = math.tanh %35 : vector<8x128xf32>
    %cst_19 = arith.constant 1.000000e+00 : f32
    %37 = vector.broadcast %cst_19 : f32 to vector<8x128xf32>
    %38 = arith.addf %36, %37 : vector<8x128xf32>
    %cst_20 = arith.constant 5.000000e-01 : f32
    %39 = vector.broadcast %cst_20 : f32 to vector<8x128xf32>
    %40 = arith.mulf %39, %38 : vector<8x128xf32>
    %41 = arith.select %27, %40, %21 : vector<8x128xi1>, vector<8x128xf32>
    %c0_21 = arith.constant 0 : index
    %c0_22 = arith.constant 0 : index
    %42 = vector.load %arg8[%c0_21, %c0_22] : memref<8x128xf32, #tpu.memory_space<vmem>>, vector<8x128xf32>
    tpu.vector_store %arg8[%c0_21, %c0_22], %41 {strides = array<i32>} : memref<8x128xf32, #tpu.memory_space<vmem>>, vector<8x128xf32>,
    return
  }
  func.func @transform_0(%arg0: i32) -> (i32, i32) {
    %c0_i32 = arith.constant 0 : i32
    %c0_i32_0 = arith.constant 0 : i32
    return %arg0, %c0_i32 : i32, i32
  }
  func.func @transform_1(%arg0: i32) -> (i32, i32) {
    %c0_i32 = arith.constant 0 : i32
    %c0_i32_0 = arith.constant 0 : i32
    %c0_i32_1 = arith.constant 0 : i32
    return %c0_i32, %c0_i32_0 : i32, i32
  }
  func.func @transform_2(%arg0: i32) -> (i32, i32) {
    %c0_i32 = arith.constant 0 : i32
    %c0_i32_0 = arith.constant 0 : i32
    %c0_i32_1 = arith.constant 0 : i32
    return %c0_i32, %c0_i32_0 : i32, i32
  }
  func.func @transform_3(%arg0: i32) -> (i32, i32) {
    %c0_i32 = arith.constant 0 : i32
    %c0_i32_0 = arith.constant 0 : i32
    %c0_i32_1 = arith.constant 0 : i32
    return %c0_i32, %c0_i32_0 : i32, i32
  }
  func.func @transform_4(%arg0: i32) -> (i32, i32) {
    %c0_i32 = arith.constant 0 : i32
    %c0_i32_0 = arith.constant 0 : i32
    %c0_i32_1 = arith.constant 0 : i32
    return %c0_i32, %c0_i32_0 : i32, i32
  }
  func.func @transform_5(%arg0: i32) -> (i32, i32) {
    %c0_i32 = arith.constant 0 : i32
    %c0_i32_0 = arith.constant 0 : i32
    %c0_i32_1 = arith.constant 0 : i32
    return %c0_i32, %c0_i32_0 : i32, i32
  }
  func.func @transform_6(%arg0: i32) -> (i32, i32) {
    %c0_i32 = arith.constant 0 : i32
    %c0_i32_0 = arith.constant 0 : i32
    %c0_i32_1 = arith.constant 0 : i32
    return %c0_i32, %c0_i32_0 : i32, i32
  }
  func.func @transform_7(%arg0: i32) -> (i32, i32) {
    %c0_i32 = arith.constant 0 : i32
    %c0_i32_0 = arith.constant 0 : i32
    return %arg0, %c0_i32 : i32, i32
  }
}

</mosaic_0001>

<llo_original>
// kernel: actor_critic_two_heads.1
$region0: #{actor_critic_two_heads.1}
  #allocation0 [shape = 'u32[]', space=smem, size = 0x4, offset = 0x4, fixed_abs, tag = 'smem constant byte address 0x4 - core index']
  #allocation1 [shape = 'u32[144,128]{1,0:T(1,128)}', space=vmem, size = 0x12000, scoped, tag = 'internal scratch']
  %s0 = inlined_call_operand.vmem [shape: f32[8,32], index: 0, kind: input, shape index: {}]
  %s1 = inlined_call_operand.vmem [shape: bf16[32,256], index: 1, kind: input, shape index: {}]
  %s2 = inlined_call_operand.vmem [shape: f32[1,256], index: 2, kind: input, shape index: {}]
  %s3 = inlined_call_operand.vmem [shape: bf16[256,64], index: 3, kind: input, shape index: {}]
  %s4 = inlined_call_operand.vmem [shape: f32[1,64], index: 4, kind: input, shape index: {}]
  %s5 = inlined_call_operand.vmem [shape: f32[64,128], index: 5, kind: input, shape index: {}]
  %s6 = inlined_call_operand.vmem [shape: f32[1,128], index: 6, kind: input, shape index: {}]
  %s7 = inlined_call_operand.vmem [shape: f32[8,128], index: 7, kind: output, shape index: {}]
  %s8 = sld [smem:[#allocation0]]
  $region38: #{actor_critic_two_heads.1} parent=0
    _
  %s10 = ssub.s32 1, %s8
  %s11 = scalar_select 0, %s10, %s8
  // Predicated region
  $region2: #{actor_critic_two_heads.1} parent=0 // pred_check
    _
  $region3: #{actor_critic_two_heads.1} parent=0 // pred_check_branch
    %13 = sbr.rel (0) target = $region5
  $region4: #{actor_critic_two_heads.1} parent=0 // pred_region
    _
  $region5: #{actor_critic_two_heads.1} parent=0 // pred_fallthru
    _
  // Predicated region
  $region6: #{actor_critic_two_heads.1} parent=0 // pred_check
    _
  $region7: #{actor_critic_two_heads.1} parent=0 // pred_check_branch
    %15 = sbr.rel (0) target = $region9
  $region8: #{actor_critic_two_heads.1} parent=0 // pred_region
    _
  $region9: #{actor_critic_two_heads.1} parent=0 // pred_fallthru
    _
  // Predicated region
  $region10: #{actor_critic_two_heads.1} parent=0 // pred_check
    _
  $region11: #{actor_critic_two_heads.1} parent=0 // pred_check_branch
    %17 = sbr.rel (0) target = $region13
  $region12: #{actor_critic_two_heads.1} parent=0 // pred_region
    _
  $region13: #{actor_critic_two_heads.1} parent=0 // pred_fallthru
    _
  // Predicated region
  $region14: #{actor_critic_two_heads.1} parent=0 // pred_check
    _
  $region15: #{actor_critic_two_heads.1} parent=0 // pred_check_branch
    %19 = sbr.rel (0) target = $region17
  $region16: #{actor_critic_two_heads.1} parent=0 // pred_region
    _
  $region17: #{actor_critic_two_heads.1} parent=0 // pred_fallthru
    _
  // Predicated region
  $region18: #{actor_critic_two_heads.1} parent=0 // pred_check
    _
  $region19: #{actor_critic_two_heads.1} parent=0 // pred_check_branch
    %21 = sbr.rel (0) target = $region21
  $region20: #{actor_critic_two_heads.1} parent=0 // pred_region
    _
  $region21: #{actor_critic_two_heads.1} parent=0 // pred_fallthru
    _
  // Predicated region
  $region22: #{actor_critic_two_heads.1} parent=0 // pred_check
    _
  $region23: #{actor_critic_two_heads.1} parent=0 // pred_check_branch
    %23 = sbr.rel (0) target = $region25
  $region24: #{actor_critic_two_heads.1} parent=0 // pred_region
    _
  $region25: #{actor_critic_two_heads.1} parent=0 // pred_fallthru
    _
  // Predicated region
  $region26: #{actor_critic_two_heads.1} parent=0 // pred_check
    _
  $region27: #{actor_critic_two_heads.1} parent=0 // pred_check_branch
    %25 = sbr.rel (0) target = $region29
  $region28: #{actor_critic_two_heads.1} parent=0 // pred_region
    _
  $region29: #{actor_critic_two_heads.1} parent=0 // pred_fallthru
    _
  %v27 = vld [vmem:[%s0] sm:$0xff]
  %v28 = vpack.c.bf16 %v27, %v27
  %v29 = vld [vmem:[%s1] sm:$0xff]
  %v30 = vld [vmem:[%s1 + $0x8] sm:$0xff]
  %v31 = vld [vmem:[%s1 + $0x10] sm:$0xff]
  %v32 = vld [vmem:[%s1 + $0x18] sm:$0xff]
  %v33 = vld [vmem:[%s2] sm:$0x3]
  %v35 = vlaneseq
  %v36 = vshrl.u32 %v35, 7
  %v37 = vsub.s32 0, %v36
  %v38 = vrot.slane %v33, %v37
  %v39 = vlaneseq
  %v40 = vshrl.u32 %v39, 7
  %v41 = vsub.s32 1, %v40
  %v42 = vrot.slane %v33, %v41
  %v49 = vunpack.c.l.b16 %v29
  %v50 = vunpack.c.h.b16 %v29
  %v51 = vunpack.c.l.b16 %v30
  %v52 = vunpack.c.h.b16 %v30
  %v53 = vunpack.c.l.b16 %v31
  %v54 = vunpack.c.h.b16 %v31
  %v55 = vunpack.c.l.b16 %v32
  %v56 = vunpack.c.h.b16 %v32
  %v57 = vpack.c.b16 %v51, %v49
  %v58 = vpack.c.b16 %v52, %v50
  %v59 = vpack.c.b16 %v55, %v53
  %v60 = vpack.c.b16 %v56, %v54
  %vm65 = vcmask 261120
  %v67 = vsel %vm65, %v28, 0
  %69 = vmatprep.subr.bf16.mxu0 %v58
  %70 = vmatpush1.bf16.msra.mxu0 %v57
  %71 = vmatprep.subr.bf16.mxu0 %v60
  %72 = vmatpush1.bf16.msra.mxu0 %v59
  %73 = vmatprep.subr.bf16.mxu0 0
  %74 = vmatpush1.bf16.msra.mxu0 0
  %75 = vmatprep.subr.bf16.mxu0 0
  %76 = vmatpush1.bf16.msra.mxu0 0
  %77 = vmatprep.subr.bf16.mxu0 0
  %78 = vmatpush1.bf16.msra.mxu0 0
  %79 = vmatprep.subr.bf16.mxu0 0
  %80 = vmatpush1.bf16.msra.mxu0 0
  %81 = vmatprep.subr.bf16.mxu0 0
  %82 = vmatpush1.bf16.msra.mxu0 0
  %83 = vmatprep.subr.bf16.mxu0 0
  %84 = vmatpush1.bf16.msra.mxu0 0
  %85 = vmatprep.subr.bf16.mxu0 0
  %86 = vmatpush1.bf16.msra.mxu0 0
  %87 = vmatprep.subr.bf16.mxu0 0
  %88 = vmatpush1.bf16.msra.mxu0 0
  %89 = vmatprep.subr.bf16.mxu0 0
  %90 = vmatpush1.bf16.msra.mxu0 0
  %91 = vmatprep.subr.bf16.mxu0 0
  %92 = vmatpush1.bf16.msra.mxu0 0
  %93 = vmatprep.subr.bf16.mxu0 0
  %94 = vmatpush1.bf16.msra.mxu0 0
  %95 = vmatprep.subr.bf16.mxu0 0
  %96 = vmatpush1.bf16.msra.mxu0 0
  %97 = vmatprep.subr.bf16.mxu0 0
  %98 = vmatpush1.bf16.msra.mxu0 0
  %99 = vmatprep.subr.bf16.mxu0 0
  %100 = vmatpush1.bf16.msra.mxu0 0
  %101 = vmatprep.mubr.bf16.mxu0 0
  %102 = vmatmul.mubr.bf16.gmra.mrb[0].mxu0 %v67
  %v103 = vpop.f32.mrb[0].mxu0
  %v104 = vadd.f32 %v38, %v103
  %v105 = vpop.f32.mrb[0].mxu0
  %v106 = vadd.f32 %v42, %v105
  %v107 = vpop.f32.mrb[0].mxu0
  %v108 = vpop.f32.mrb[0].mxu0
  %109 = vdwg.mxu0
  %v110 = vmax.f32 %v104, 0.0
  %v111 = vmax.f32 %v106, 0.0
  %v112 = vpack.c.bf16 %v110, %v110
  %v113 = vpack.c.bf16 %v111, %v111
  %v114 = vld [vmem:[%s3] sm:$0xf]
  %v115 = vld [vmem:[%s3 + $0x4] sm:$0xf]
  %v116 = vld [vmem:[%s3 + $0x8] sm:$0xf]
  %v117 = vld [vmem:[%s3 + $0xc] sm:$0xf]
  %v118 = vld [vmem:[%s3 + $0x10] sm:$0xf]
  %v119 = vld [vmem:[%s3 + $0x14] sm:$0xf]
  %v120 = vld [vmem:[%s3 + $0x18] sm:$0xf]
  %v121 = vld [vmem:[%s3 + $0x1c] sm:$0xf]
  %v122 = vld [vmem:[%s3 + $0x20] sm:$0xf]
  %v123 = vld [vmem:[%s3 + $0x24] sm:$0xf]
  %v124 = vld [vmem:[%s3 + $0x28] sm:$0xf]
  %v125 = vld [vmem:[%s3 + $0x2c] sm:$0xf]
  %v126 = vld [vmem:[%s3 + $0x30] sm:$0xf]
  %v127 = vld [vmem:[%s3 + $0x34] sm:$0xf]
  %v128 = vld [vmem:[%s3 + $0x38] sm:$0xf]
  %v129 = vld [vmem:[%s3 + $0x3c] sm:$0xf]
  %v130 = vld [vmem:[%s3 + $0x40] sm:$0xf]
  %v131 = vld [vmem:[%s3 + $0x44] sm:$0xf]
  %v132 = vld [vmem:[%s3 + $0x48] sm:$0xf]
  %v133 = vld [vmem:[%s3 + $0x4c] sm:$0xf]
  %v134 = vld [vmem:[%s3 + $0x50] sm:$0xf]
  %v135 = vld [vmem:[%s3 + $0x54] sm:$0xf]
  %v136 = vld [vmem:[%s3 + $0x58] sm:$0xf]
  %v137 = vld [vmem:[%s3 + $0x5c] sm:$0xf]
  %v138 = vld [vmem:[%s3 + $0x60] sm:$0xf]
  %v139 = vld [vmem:[%s3 + $0x64] sm:$0xf]
  %v140 = vld [vmem:[%s3 + $0x68] sm:$0xf]
  %v141 = vld [vmem:[%s3 + $0x6c] sm:$0xf]
  %v142 = vld [vmem:[%s3 + $0x70] sm:$0xf]
  %v143 = vld [vmem:[%s3 + $0x74] sm:$0xf]
  %v144 = vld [vmem:[%s3 + $0x78] sm:$0xf]
  %v145 = vld [vmem:[%s3 + $0x7c] sm:$0xf]
  %v146 = vld [vmem:[%s4] sm:$0x1]
  %v148 = vlaneseq
  %v149 = vshrl.u32 %v148, 7
  %v150 = vsub.s32 0, %v149
  %v151 = vrot.slane %v146, %v150
  %v185 = vunpack.c.l.b16 %v114
  %v186 = vunpack.c.l.b16 %v115
  %v187 = vunpack.c.l.b16 %v116
  %v188 = vunpack.c.l.b16 %v117
  %v189 = vunpack.c.l.b16 %v118
  %v190 = vunpack.c.l.b16 %v119
  %v191 = vunpack.c.l.b16 %v120
  %v192 = vunpack.c.l.b16 %v121
  %v193 = vunpack.c.l.b16 %v122
  %v194 = vunpack.c.l.b16 %v123
  %v195 = vunpack.c.l.b16 %v124
  %v196 = vunpack.c.l.b16 %v125
  %v197 = vunpack.c.l.b16 %v126
  %v198 = vunpack.c.l.b16 %v127
  %v199 = vunpack.c.l.b16 %v128
  %v200 = vunpack.c.l.b16 %v129
  %v201 = vunpack.c.l.b16 %v130
  %v202 = vunpack.c.l.b16 %v131
  %v203 = vunpack.c.l.b16 %v132
  %v204 = vunpack.c.l.b16 %v133
  %v205 = vunpack.c.l.b16 %v134
  %v206 = vunpack.c.l.b16 %v135
  %v207 = vunpack.c.l.b16 %v136
  %v208 = vunpack.c.l.b16 %v137
  %v209 = vunpack.c.l.b16 %v138
  %v210 = vunpack.c.l.b16 %v139
  %v211 = vunpack.c.l.b16 %v140
  %v212 = vunpack.c.l.b16 %v141
  %v213 = vunpack.c.l.b16 %v142
  %v214 = vunpack.c.l.b16 %v143
  %v215 = vunpack.c.l.b16 %v144
  %v216 = vunpack.c.l.b16 %v145
  %v217 = vpack.c.b16 %v186, %v185
  %v218 = vpack.c.b16 %v188, %v187
  %v219 = vpack.c.b16 %v190, %v189
  %v220 = vpack.c.b16 %v192, %v191
  %v221 = vpack.c.b16 %v194, %v193
  %v222 = vpack.c.b16 %v196, %v195
  %v223 = vpack.c.b16 %v198, %v197
  %v224 = vpack.c.b16 %v200, %v199
  %v225 = vpack.c.b16 %v202, %v201
  %v226 = vpack.c.b16 %v204, %v203
  %v227 = vpack.c.b16 %v206, %v205
  %v228 = vpack.c.b16 %v208, %v207
  %v229 = vpack.c.b16 %v210, %v209
  %v230 = vpack.c.b16 %v212, %v211
  %v231 = vpack.c.b16 %v214, %v213
  %v232 = vpack.c.b16 %v216, %v215
  %249 = vmatprep.subr.bf16.mxu0 0
  %250 = vmatpush1.bf16.msra.mxu0 %v217
  %251 = vmatprep.subr.bf16.mxu0 0
  %252 = vmatpush1.bf16.msra.mxu0 %v218
  %253 = vmatprep.subr.bf16.mxu0 0
  %254 = vmatpush1.bf16.msra.mxu0 %v219
  %255 = vmatprep.subr.bf16.mxu0 0
  %256 = vmatpush1.bf16.msra.mxu0 %v220
  %257 = vmatprep.subr.bf16.mxu0 0
  %258 = vmatpush1.bf16.msra.mxu0 %v221
  %259 = vmatprep.subr.bf16.mxu0 0
  %260 = vmatpush1.bf16.msra.mxu0 %v222
  %261 = vmatprep.subr.bf16.mxu0 0
  %262 = vmatpush1.bf16.msra.mxu0 %v223
  %263 = vmatprep.subr.bf16.mxu0 0
  %264 = vmatpush1.bf16.msra.mxu0 %v224
  %265 = vmatprep.subr.bf16.mxu0 0
  %266 = vmatpush1.bf16.msra.mxu0 %v225
  %267 = vmatprep.subr.bf16.mxu0 0
  %268 = vmatpush1.bf16.msra.mxu0 %v226
  %269 = vmatprep.subr.bf16.mxu0 0
  %270 = vmatpush1.bf16.msra.mxu0 %v227
  %271 = vmatprep.subr.bf16.mxu0 0
  %272 = vmatpush1.bf16.msra.mxu0 %v228
  %273 = vmatprep.subr.bf16.mxu0 0
  %274 = vmatpush1.bf16.msra.mxu0 %v229
  %275 = vmatprep.subr.bf16.mxu0 0
  %276 = vmatpush1.bf16.msra.mxu0 %v230
  %277 = vmatprep.subr.bf16.mxu0 0
  %278 = vmatpush1.bf16.msra.mxu0 %v231
  %279 = vmatprep.subr.bf16.mxu0 0
  %280 = vmatpush1.bf16.msra.mxu0 %v232
  %281 = vmatprep.mubr.bf16.mxu0 %v113
  %282 = vmatmul.mubr.bf16.gmra.mrb[0].mxu0 %v112
  %v283 = vpop.f32.mrb[0].mxu0
  %v284 = vadd.f32 %v151, %v283
  %v285 = vpop.f32.mrb[0].mxu0
  %v286 = vpop.f32.mrb[0].mxu0
  %v287 = vpop.f32.mrb[0].mxu0
  %288 = vdwg.mxu0
  %v289 = vmax.f32 %v284, 0.0
  %v290 = vld [vmem:[%s5] sm:$0xff]
  %v291 = vld [vmem:[%s5 + $0x8] sm:$0xff]
  %v292 = vld [vmem:[%s5 + $0x10] sm:$0xff]
  %v293 = vld [vmem:[%s5 + $0x18] sm:$0xff]
  %v294 = vld [vmem:[%s5 + $0x20] sm:$0xff]
  %v295 = vld [vmem:[%s5 + $0x28] sm:$0xff]
  %v296 = vld [vmem:[%s5 + $0x30] sm:$0xff]
  %v297 = vld [vmem:[%s5 + $0x38] sm:$0xff]
  %v298 = vld [vmem:[%s6] sm:$0x1]
  %v300 = vlaneseq
  %v301 = vshrl.u32 %v300, 7
  %v302 = vsub.s32 0, %v301
  %v303 = vrot.slane %v298, %v302
  %vm305 = vcmask 523264
  %v307 = vsel %vm305, %v289, 0
  %309 = vmatprep.subr.mxu0 0.0
  %310 = vmatpush1.msra.mxu0 %v290
  %311 = vmatprep.subr.mxu0 0.0
  %312 = vmatpush1.msra.mxu0 %v291
  %313 = vmatprep.subr.mxu0 0.0
  %314 = vmatpush1.msra.mxu0 %v292
  %315 = vmatprep.subr.mxu0 0.0
  %316 = vmatpush1.msra.mxu0 %v293
  %317 = vmatprep.subr.mxu0 0.0
  %318 = vmatpush1.msra.mxu0 %v294
  %319 = vmatprep.subr.mxu0 0.0
  %320 = vmatpush1.msra.mxu0 %v295
  %321 = vmatprep.subr.mxu0 0.0
  %322 = vmatpush1.msra.mxu0 %v296
  %323 = vmatprep.subr.mxu0 0.0
  %324 = vmatpush1.msra.mxu0 %v297
  %325 = vmatprep.subr.mxu0 0.0
  %326 = vmatpush1.msra.mxu0 0.0
  %327 = vmatprep.subr.mxu0 0.0
  %328 = vmatpush1.msra.mxu0 0.0
  %329 = vmatprep.subr.mxu0 0.0
  %330 = vmatpush1.msra.mxu0 0.0
  %331 = vmatprep.subr.mxu0 0.0
  %332 = vmatpush1.msra.mxu0 0.0
  %333 = vmatprep.subr.mxu0 0.0
  %334 = vmatpush1.msra.mxu0 0.0
  %335 = vmatprep.subr.mxu0 0.0
  %336 = vmatpush1.msra.mxu0 0.0
  %337 = vmatprep.subr.mxu0 0.0
  %338 = vmatpush1.msra.mxu0 0.0
  %339 = vmatprep.subr.mxu0 0.0
  %340 = vmatpush1.msra.mxu0 0.0
  %341 = vmatprep.subr.mxu0 0.0
  %342 = vmatpush1.msra.mxu0 0.0
  %343 = vmatprep.subr.mxu0 0.0
  %344 = vmatpush1.msra.mxu0 0.0
  %345 = vmatprep.subr.mxu0 0.0
  %346 = vmatpush1.msra.mxu0 0.0
  %347 = vmatprep.subr.mxu0 0.0
  %348 = vmatpush1.msra.mxu0 0.0
  %349 = vmatprep.subr.mxu0 0.0
  %350 = vmatpush1.msra.mxu0 0.0
  %351 = vmatprep.subr.mxu0 0.0
  %352 = vmatpush1.msra.mxu0 0.0
  %353 = vmatprep.subr.mxu0 0.0
  %354 = vmatpush1.msra.mxu0 0.0
  %355 = vmatprep.subr.mxu0 0.0
  %356 = vmatpush1.msra.mxu0 0.0
  %357 = vmatprep.subr.mxu0 0.0
  %358 = vmatpush1.msra.mxu0 0.0
  %359 = vmatprep.subr.mxu0 0.0
  %360 = vmatpush1.msra.mxu0 0.0
  %361 = vmatprep.subr.mxu0 0.0
  %362 = vmatpush1.msra.mxu0 0.0
  %363 = vmatprep.subr.mxu0 0.0
  %364 = vmatpush1.msra.mxu0 0.0
  %365 = vmatprep.subr.mxu0 0.0
  %366 = vmatpush1.msra.mxu0 0.0
  %367 = vmatprep.subr.mxu0 0.0
  %368 = vmatpush1.msra.mxu0 0.0
  %369 = vmatprep.subr.mxu0 0.0
  %370 = vmatpush1.msra.mxu0 0.0
  %371 = vmatprep.subr.mxu0 0.0
  %372 = vmatpush1.msra.mxu0 0.0
  %373 = vmatprep.mubr.f32.mxu0 0.0
  %374 = vmatmul.mubr.f32.gmra.mrb[0].mxu0 %v307
  %v375 = vpop.f32.mrb[0].mxu0
  %v376 = vadd.f32 %v303, %v375
  %v377 = vpop.f32.mrb[0].mxu0
  %378 = vdwg.mxu0
  %v379 = vlaneseq
  %v380 = vand.u32 %v379, 127
  %vm381 = vcmp.ge.s32.totalorder %v380, 64
  %vm382 = vcmp.lt.s32.totalorder %v380, 66
  %vm383 = vmand %vm381, %vm382
  %v384 = vsel %vm383, %v376, 0.0
  %385 = vrot.lane.b32.xlu0 %v384, 127
  %v386 = vpop.permute.xlu0 %385
  %387 = vrot.lane.b32.xlu0 %v384, 1
  %v388 = vpop.permute.xlu0 %387
  %v389 = vadd.f32 %v386, %v388
  %v390 = vsub.f32 %v376, %v389
  %v391 = vmul.f32 %v390, 0.5
  %v392 = vtanh.pop %v391
  %v393 = vadd.f32 %v392, 1.0
  %v394 = vmul.f32 %v393, 0.5
  %v395 = vsel %vm383, %v394, %v376
  %396 = vst [vmem:[%s7] sm:$0xff] %v395
  // Predicated region
  $region30: #{actor_critic_two_heads.1} parent=0 // pred_check
    _
  $region31: #{actor_critic_two_heads.1} parent=0 // pred_check_branch
    %398 = sbr.rel (0) target = $region33
  $region32: #{actor_critic_two_heads.1} parent=0 // pred_region
    _
  $region33: #{actor_critic_two_heads.1} parent=0 // pred_fallthru
    _
  // Predicated region
  $region34: #{actor_critic_two_heads.1} parent=0 // pred_check
    _
  $region35: #{actor_critic_two_heads.1} parent=0 // pred_check_branch
    %400 = sbr.rel (0) target = $region37
  $region36: #{actor_critic_two_heads.1} parent=0 // pred_region
    _
  $region37: #{actor_critic_two_heads.1} parent=0 // pred_fallthru
    _

</llo_original>
